<compile_context>
chip_gen: v6e
topology: v6e:2x2x1
jax: 0.10.0
libtpu: 0.0.40
codegen_flags: <defaults>
</compile_context>

<pallas_src>
import functools

import jax
import jax.numpy as jnp
from jax.experimental import pallas as pl
from jax.experimental.pallas import tpu as pltpu

_LANES = 128
_VMEM_BUDGET = 24 * 1024 * 1024  # conservative: fits v7x 32 MiB scoped VMEM


def _logits_kernel(x_ref, w_ref, b_ref, logits_ref):
    # model forward only: logits = x @ W + b   (bf16 MXU inputs, f32 accumulate)
    logits_ref[...] = (
        jnp.dot(x_ref[...], w_ref[...], preferred_element_type=jnp.float32)
        + b_ref[...]
    ).astype(logits_ref.dtype)


def _dce_loss_kernel(x_ref, w_ref, b_ref, labels_ref, mask_ref,
                     pp_ref, pn_ref, *, num_classes, batch, tile_b):
    # ---- model forward (MXU) ----
    logits = (
        jnp.dot(x_ref[...], w_ref[...], preferred_element_type=jnp.float32)
        + b_ref[...]
    )                                                     # (TB, Cpad) f32

    # labels/mask are (TB, 1) columns: they are consumed sublane-wise for the
    # one-hot compare, and their DMA bytes are negligible vs. the x tile.
    labels = labels_ref[...]                              # (TB, 1) int32
    mask = mask_ref[...]                                  # (TB, 1) f32 (1=p, 0=q)
    tb, c_pad = logits.shape

    col = jax.lax.broadcasted_iota(jnp.int32, (tb, c_pad), 1)
    class_valid = col < num_classes                       # mask padded classes
    onehot = col == labels

    # numerically stable logsumexp over the *valid* classes
    neg = jnp.float32(-1e30)
    lmask = jnp.where(class_valid, logits, neg)
    m = jnp.max(lmask, axis=1, keepdims=True)             # (TB, 1)
    lse = m + jnp.log(jnp.sum(jnp.exp(lmask - m), axis=1, keepdims=True))

    # reuse row_sum: ce_n numerator = row_sum - label_logit
    lvalid = jnp.where(class_valid, logits, 0.0)
    row_sum = jnp.sum(lvalid, axis=1, keepdims=True)              # (TB, 1)
    label_logit = jnp.sum(jnp.where(onehot, logits, 0.0), axis=1, keepdims=True)

    ce_p = lse - label_logit                                       # standard CE
    # NOTE: num_classes == 1 would divide by zero (matches original dce_loss).
    ce_n = lse - (row_sum - label_logit) / jnp.float32(num_classes - 1)

    # mask off batch-padding rows (rows >= true batch size)
    row = (jax.lax.broadcasted_iota(jnp.int32, (tb, 1), 0)
           + pl.program_id(0) * tile_b)
    row_valid = (row < batch).astype(jnp.float32)

    s_p = jnp.sum(row_valid * mask * ce_p)                # masked (p) partial sum
    s_n = jnp.sum(row_valid * (1.0 - mask) * ce_n)        # unmasked (q) partial sum

    # lane-dense per-tile partial outputs; wrapper applies alpha and the mean.
    pp_ref[...] = jnp.broadcast_to(s_p, (1, 1, _LANES)).astype(jnp.float32)
    pn_ref[...] = jnp.broadcast_to(s_n, (1, 1, _LANES)).astype(jnp.float32)


def _choose_tile_b(batch, d, c_pad, in_itemsize):
    """Largest batch tile (multiple of 8, <=1024) fitting the VMEM budget."""
    resident = d * c_pad * in_itemsize + c_pad * 4        # W + b stay resident
    tb = 1024
    while tb > 8:
        per_tile = 2 * (tb * d * in_itemsize + tb * c_pad * 4 + 2 * tb * 4)
        if per_tile + resident <= _VMEM_BUDGET:
            break
        tb //= 2
    tb = max(8, tb)
    return min(tb, max(8, ((batch + 7) // 8) * 8))


def detectron_forward(x, w, b, labels=None, mask=None, *,
                      mxu_dtype=jnp.bfloat16):
    """Pallas-backed DetectronModule.forward.

    Returns logits if `labels` is None, otherwise the scalar DCE loss
    (integer labels, use_random_vectors=False, alpha = 1/(1 + #unmasked)).
    """
    B, D = x.shape
    C = w.shape[1]
    c_pad = ((C + _LANES - 1) // _LANES) * _LANES
    in_itemsize = jnp.dtype(mxu_dtype).itemsize

    tb = _choose_tile_b(B, D, c_pad, in_itemsize)
    num_tiles = pl.cdiv(B, tb)
    b_pad = num_tiles * tb

    # pad operands: batch -> b_pad, classes -> c_pad (zeros; masked in-kernel)
    x_p = jnp.zeros((b_pad, D), mxu_dtype).at[:B].set(x.astype(mxu_dtype))
    w_p = jnp.zeros((D, c_pad), mxu_dtype).at[:, :C].set(w.astype(mxu_dtype))
    b_p = jnp.zeros((1, c_pad), jnp.float32).at[0, :C].set(
        b.astype(jnp.float32).reshape(C))

    cparams = pltpu.CompilerParams(
        dimension_semantics=("parallel",),
        vmem_limit_bytes=32 * 1024 * 1024,
    )

    if labels is None:
        # ---- inference path: logits only (no loss math, no label/mask DMA) ----
        logits_padded = pl.pallas_call(
            _logits_kernel,
            out_shape=jax.ShapeDtypeStruct((b_pad, c_pad), jnp.float32),
            grid_spec=pltpu.PrefetchScalarGridSpec(
                num_scalar_prefetch=0,
                grid=(num_tiles,),
                in_specs=[
                    pl.BlockSpec((tb, D), lambda i: (i, 0)),
                    pl.BlockSpec((D, c_pad), lambda i: (0, 0)),
                    pl.BlockSpec((1, c_pad), lambda i: (0, 0)),
                ],
                out_specs=pl.BlockSpec((tb, c_pad), lambda i: (i, 0)),
            ),
            compiler_params=cparams,
        )(x_p, w_p, b_p)
        return logits_padded[:B, :C]

    # ---- training path: fused forward + DCE loss ----
    assert mask is not None, "mask is required when labels are provided"
    maskf = mask.astype(jnp.float32).reshape(B)
    labels_p = jnp.zeros((b_pad, 1), jnp.int32).at[:B, 0].set(
        labels.astype(jnp.int32).reshape(B))
    mask_p = jnp.ones((b_pad, 1), jnp.float32).at[:B, 0].set(maskf)

    pp, pn = pl.pallas_call(
        functools.partial(_dce_loss_kernel,
                          num_classes=C, batch=B, tile_b=tb),
        out_shape=(
            jax.ShapeDtypeStruct((num_tiles, 1, _LANES), jnp.float32),
            jax.ShapeDtypeStruct((num_tiles, 1, _LANES), jnp.float32),
        ),
        grid_spec=pltpu.PrefetchScalarGridSpec(
            num_scalar_prefetch=0,
            grid=(num_tiles,),
            in_specs=[
                pl.BlockSpec((tb, D), lambda i: (i, 0)),
                pl.BlockSpec((D, c_pad), lambda i: (0, 0)),
                pl.BlockSpec((1, c_pad), lambda i: (0, 0)),
                pl.BlockSpec((tb, 1), lambda i: (i, 0)),
                pl.BlockSpec((tb, 1), lambda i: (i, 0)),
            ],
            out_specs=(
                pl.BlockSpec((1, 1, _LANES), lambda i: (i, 0, 0)),
                pl.BlockSpec((1, 1, _LANES), lambda i: (i, 0, 0)),
            ),
        ),
        compiler_params=cparams,
    )(x_p, w_p, b_p, labels_p, mask_p)

    # global reductions hoisted to the wrapper (keeps the grid axis "parallel")
    sum_p = jnp.sum(pp[:, 0, 0])
    sum_n = jnp.sum(pn[:, 0, 0])
    n_q = jnp.sum(1.0 - maskf)
    alpha = 1.0 / (1.0 + n_q)       # DCELoss default (alpha=None)
    return (sum_p + alpha * sum_n) / jnp.float32(B)


if __name__ == "__main__":
    # small shapes: batch=8, feature dim=32, num_classes=4
    B, D, C = 8, 32, 4
    key = jax.random.PRNGKey(0)
    kx, kw, kb, kl, km = jax.random.split(key, 5)

    x = jax.random.normal(kx, (B, D), jnp.float32)
    # deterministic "model" parameters (synthetic linear classifier)
    w = jax.random.normal(kw, (D, C), jnp.float32) * 0.1
    b = jax.random.normal(kb, (C,), jnp.float32) * 0.01
    labels = jax.random.randint(kl, (B,), 0, C, jnp.int32)
    mask = jax.random.bernoulli(km, 0.5, (B,))

    # forward pass without labels -> logits
    logits = detectron_forward(x, w, b)
    jax.block_until_ready(logits)

    # forward pass with labels & mask -> DCE loss scalar
    loss = detectron_forward(x, w, b, labels=labels, mask=mask)
    jax.block_until_ready(loss)

    # pure-JAX reference (matching the kernel's bf16 input rounding, f32 accum)
    xb = x.astype(jnp.bfloat16).astype(jnp.float32)
    wb = w.astype(jnp.bfloat16).astype(jnp.float32)
    ref_logits = xb @ wb + b
    onehot = jax.nn.one_hot(labels, C)
    lse = jax.scipy.special.logsumexp(ref_logits, axis=1)
    ce_p = lse - jnp.sum(ref_logits * onehot, axis=1)
    ce_n = -jnp.sum(ref_logits * (1.0 - onehot), axis=1) / (C - 1) + lse
    maskf = mask.astype(jnp.float32)
    alpha = 1.0 / (1.0 + jnp.sum(1.0 - maskf))
    ref_loss = jnp.mean(maskf * ce_p + (1.0 - maskf) * alpha * ce_n)

    assert jnp.allclose(logits, ref_logits, atol=1e-3, rtol=1e-3)
    assert jnp.allclose(loss, ref_loss, atol=1e-4, rtol=1e-4)

    print("KERNEL_OK")
</pallas_src>

<mosaic_0001>
module attributes {stable_mosaic.version = 11 : i64} {
  func.func @_logits_kernel(%arg0: i32, %arg1: memref<8x32xbf16, #tpu.memory_space<vmem>>, %arg2: memref<32x128xbf16, #tpu.memory_space<vmem>>, %arg3: memref<1x128xf32, #tpu.memory_space<vmem>>, %arg4: memref<8x128xf32, #tpu.memory_space<vmem>>) attributes {dimension_semantics = [#tpu.dimension_semantics<parallel>], iteration_bounds = array<i64: 1>, scalar_prefetch = 0 : i64, scratch_operands = 0 : i64, tpu.core_type = #tpu.core_type<tc>, window_params = [{transform_indices = @transform_0, window_bounds = array<i64: 8, 32>}, {pipeline_mode = #tpu.pipeline_mode<synchronous>, transform_indices = @transform_1, window_bounds = array<i64: 32, 128>}, {pipeline_mode = #tpu.pipeline_mode<synchronous>, transform_indices = @transform_2, window_bounds = array<i64: 1, 128>}, {transform_indices = @transform_3, window_bounds = array<i64: 8, 128>}]} {
    %c0 = arith.constant 0 : index
    %c0_0 = arith.constant 0 : index
    %0 = vector.load %arg1[%c0, %c0_0] : memref<8x32xbf16, #tpu.memory_space<vmem>>, vector<8x32xbf16>
    %c0_1 = arith.constant 0 : index
    %c0_2 = arith.constant 0 : index
    %1 = vector.load %arg2[%c0_1, %c0_2] : memref<32x128xbf16, #tpu.memory_space<vmem>>, vector<32x128xbf16>
    %cst = arith.constant dense<0.000000e+00> : vector<8x128xf32>
    %2 = tpu.matmul %0, %1, %cst {dimension_numbers = #tpu.dot_dimension_numbers<[1], [0], [0], [1], [0, 0, 1, 1], [], []>} : vector<8x32xbf16>, vector<32x128xbf16>, vector<8x128xf32> -> vector<8x128xf32>
    %c0_3 = arith.constant 0 : index
    %c0_4 = arith.constant 0 : index
    %3 = vector.load %arg3[%c0_3, %c0_4] : memref<1x128xf32, #tpu.memory_space<vmem>>, vector<1x128xf32>
    %4 = vector.broadcast %3 : vector<1x128xf32> to vector<8x128xf32>
    %5 = arith.addf %2, %4 : vector<8x128xf32>
    %c0_5 = arith.constant 0 : index
    %c0_6 = arith.constant 0 : index
    %6 = vector.load %arg4[%c0_5, %c0_6] : memref<8x128xf32, #tpu.memory_space<vmem>>, vector<8x128xf32>
    tpu.vector_store %arg4[%c0_5, %c0_6], %5 {strides = array<i32>} : memref<8x128xf32, #tpu.memory_space<vmem>>, vector<8x128xf32>,
    return
  }
  func.func @transform_0(%arg0: i32) -> (i32, i32) {
    %c0_i32 = arith.constant 0 : i32
    %c0_i32_0 = arith.constant 0 : i32
    return %arg0, %c0_i32 : i32, i32
  }
  func.func @transform_1(%arg0: i32) -> (i32, i32) {
    %c0_i32 = arith.constant 0 : i32
    %c0_i32_0 = arith.constant 0 : i32
    %c0_i32_1 = arith.constant 0 : i32
    return %c0_i32, %c0_i32_0 : i32, i32
  }
  func.func @transform_2(%arg0: i32) -> (i32, i32) {
    %c0_i32 = arith.constant 0 : i32
    %c0_i32_0 = arith.constant 0 : i32
    %c0_i32_1 = arith.constant 0 : i32
    return %c0_i32, %c0_i32_0 : i32, i32
  }
  func.func @transform_3(%arg0: i32) -> (i32, i32) {
    %c0_i32 = arith.constant 0 : i32
    %c0_i32_0 = arith.constant 0 : i32
    return %arg0, %c0_i32 : i32, i32
  }
}

</mosaic_0001>

<llo_original>
// kernel: tpu_custom_call.1
$region0: #{tpu_custom_call.1}
  #allocation0 [shape = 'u32[]', space=smem, size = 0x4, offset = 0x4, fixed_abs, tag = 'smem constant byte address 0x4 - core index']
  #allocation1 [shape = 'u32[144,128]{1,0:T(1,128)}', space=vmem, size = 0x12000, scoped, tag = 'internal scratch']
  %s0 = inlined_call_operand.hbm [shape: bf16[8,32], index: 0, kind: input, shape index: {}]
  %s1 = inlined_call_operand.hbm [shape: bf16[32,128], index: 1, kind: input, shape index: {}]
  %s2 = inlined_call_operand.vmem [shape: f32[1,128], index: 2, kind: input, shape index: {}]
  %s3 = inlined_call_operand.hbm [shape: f32[8,128], index: 3, kind: output, shape index: {}]
  %s4 = sld [smem:[#allocation0]]
  $region30: #{tpu_custom_call.1} parent=0
    _
  %s6 = ssub.s32 1, %s4
  %s7 = scalar_select 0, %s6, %s4
  $region1: #{tpu_custom_call.1} parent=0
    #allocation2 [shape = 'u8[2048]{0}', space=vmem, size = 0x800, scoped, tag = 'input window, operand 0, single buffered']
    #allocation3 [shape = 's32[1]{0}', space=sflag, size = 0x4, scoped, tag = 'scoped memory for tpu_custom_call.1']
    #allocation4 [shape = 's32[1]{0}', space=sflag, size = 0x4, scoped, tag = 'scoped memory for tpu_custom_call.1']
    #allocation5 [shape = 'u8[8192]{0}', space=vmem, size = 0x2000, scoped, tag = 'input window, operand 1, single buffered']
    #allocation6 [shape = 's32[1]{0}', space=sflag, size = 0x4, scoped, tag = 'scoped memory for tpu_custom_call.1']
    #allocation7 [shape = 'u8[4096]{0}', space=vmem, size = 0x1000, scoped, tag = 'output window, operand 0, single buffered']
    %8 = vsyncpa [#allocation3], 0
    %9 = vsyncpa [#allocation6], 0
    %10 = vsyncpa [#allocation4], 0
    // Predicated region
    $region2: #{tpu_custom_call.1} parent=1 // pred_check
      _
    $region3: #{tpu_custom_call.1} parent=1 // pred_check_branch
      %12 = sbr.rel (0) target = $region5
    $region4: #{tpu_custom_call.1} parent=1 // pred_region
      %s14 = ssub.s32 64, 64
      %15 = vsyncadd [#allocation3], %s14
      %s17 = sshll.u32 [#allocation2], 4
      %s18 = int_to_ptr.vmem [resolvable:$true] %s17
      %20 = dma.hbm_to_vmem [thread:$0]  %s0, 64, %s18, [#allocation3]
    $region5: #{tpu_custom_call.1} parent=1 // pred_fallthru
      _
    // Predicated region
    $region6: #{tpu_custom_call.1} parent=1 // pred_check
      _
    $region7: #{tpu_custom_call.1} parent=1 // pred_check_branch
      %22 = sbr.rel (0) target = $region9
    $region8: #{tpu_custom_call.1} parent=1 // pred_region
      %s24 = ssub.s32 256, 256
      %25 = vsyncadd [#allocation6], %s24
      %s26 = sshll.u32 [#allocation5], 4
      %s27 = int_to_ptr.vmem [resolvable:$true] %s26
      %32 = dma.hbm_to_vmem [thread:$0]  %s1, 256, %s27, [#allocation6], 64, 64, 4
    $region9: #{tpu_custom_call.1} parent=1 // pred_fallthru
      _
    // Predicated region
    $region10: #{tpu_custom_call.1} parent=1 // pred_check
      _
    $region11: #{tpu_custom_call.1} parent=1 // pred_check_branch
      %34 = sbr.rel (0) target = $region13
    $region12: #{tpu_custom_call.1} parent=1 // pred_region
      _
    $region13: #{tpu_custom_call.1} parent=1 // pred_fallthru
      _
    // Predicated region
    $region14: #{tpu_custom_call.1} parent=1 // pred_check
      _
    $region15: #{tpu_custom_call.1} parent=1 // pred_check_branch
      %36 = sbr.rel (0) target = $region17
    $region16: #{tpu_custom_call.1} parent=1 // pred_region
      %37 = dma.done [#allocation3], 64
    $region17: #{tpu_custom_call.1} parent=1 // pred_fallthru
      _
    // Predicated region
    $region18: #{tpu_custom_call.1} parent=1 // pred_check
      _
    $region19: #{tpu_custom_call.1} parent=1 // pred_check_branch
      %39 = sbr.rel (0) target = $region21
    $region20: #{tpu_custom_call.1} parent=1 // pred_region
      %40 = dma.done [#allocation6], 256
    $region21: #{tpu_custom_call.1} parent=1 // pred_fallthru
      _
    %v42 = vld [vmem:[#allocation2] sm:$0xf]
    %v43 = vld [vmem:[#allocation5] sm:$0xf]
    %v44 = vld [vmem:[#allocation5 + $0x4] sm:$0xf]
    %v45 = vld [vmem:[#allocation5 + $0x8] sm:$0xf]
    %v46 = vld [vmem:[#allocation5 + $0xc] sm:$0xf]
    %v47 = vld [vmem:[%s2] sm:$0x1]
    %v49 = vlaneseq
    %v50 = vshrl.u32 %v49, 7
    %v51 = vsub.s32 0, %v50
    %v52 = vrot.slane %v47, %v51
    %v58 = vunpack.c.l.b16 %v43
    %v59 = vunpack.c.l.b16 %v44
    %v60 = vunpack.c.l.b16 %v45
    %v61 = vunpack.c.l.b16 %v46
    %v62 = vpack.c.b16 %v59, %v58
    %v63 = vpack.c.b16 %v61, %v60
    %vm66 = vcmask 261120
    %v68 = vsel %vm66, %v42, 0
    %70 = vmatprep.subr.bf16.mxu0 0
    %71 = vmatpush1.bf16.msra.mxu0 0
    %72 = vmatprep.subr.bf16.mxu0 0
    %73 = vmatpush1.bf16.msra.mxu0 0
    %74 = vmatprep.subr.bf16.mxu0 0
    %75 = vmatpush1.bf16.msra.mxu0 0
    %76 = vmatprep.subr.bf16.mxu0 0
    %77 = vmatpush1.bf16.msra.mxu0 0
    %78 = vmatprep.subr.bf16.mxu0 0
    %79 = vmatpush1.bf16.msra.mxu0 0
    %80 = vmatprep.subr.bf16.mxu0 0
    %81 = vmatpush1.bf16.msra.mxu0 0
    %82 = vmatprep.subr.bf16.mxu0 0
    %83 = vmatpush1.bf16.msra.mxu0 %v63
    %84 = vmatprep.subr.bf16.mxu0 0
    %85 = vmatpush1.bf16.msra.mxu0 %v62
    %86 = vmatprep.subr.bf16.mxu0 0
    %87 = vmatpush2.bf16.msra.mxu0 0
    %88 = vmatprep.subr.bf16.mxu0 0
    %89 = vmatpush2.bf16.msra.mxu0 0
    %90 = vmatprep.subr.bf16.mxu0 0
    %91 = vmatpush2.bf16.msra.mxu0 0
    %92 = vmatprep.subr.bf16.mxu0 0
    %93 = vmatpush2.bf16.msra.mxu0 0
    %94 = vmatprep.subr.bf16.mxu0 0
    %95 = vmatpush2.bf16.msra.mxu0 0
    %96 = vmatprep.subr.bf16.mxu0 0
    %97 = vmatpush2.bf16.msra.mxu0 0
    %98 = vmatprep.subr.bf16.mxu0 0
    %99 = vmatpush2.bf16.msra.mxu0 0
    %100 = vmatprep.subr.bf16.mxu0 0
    %101 = vmatpush2.bf16.msra.mxu0 0
    %102 = vmatprep.mubr.bf16.mxu0 0
    %103 = vmatmul.mubr.bf16.gmra.mxu0 %v68
    %v104 = vpop.f32.mrf.mxu0
    %v105 = vadd.f32 %v52, %v104
    %v106 = vpop.f32.mrf.mxu0
    %v107 = vpop.f32.mrf.mxu0
    %v108 = vpop.f32.mrf.mxu0
    %109 = vdwg.mxu0
    %110 = vst [vmem:[#allocation7] sm:$0xff] %v105
    // Predicated region
    $region22: #{tpu_custom_call.1} parent=1 // pred_check
      _
    $region23: #{tpu_custom_call.1} parent=1 // pred_check_branch
      %112 = sbr.rel (0) target = $region25
    $region24: #{tpu_custom_call.1} parent=1 // pred_region
      %s114 = ssub.s32 128, 128
      %115 = vsyncadd [#allocation4], %s114
      %s117 = sshll.u32 [#allocation7], 4
      %s118 = int_to_ptr.vmem [resolvable:$true] %s117
      %120 = dma.vmem_to_hbm [thread:$0]  %s118, 128, %s3, [#allocation4]
    $region25: #{tpu_custom_call.1} parent=1 // pred_fallthru
      _
    // Predicated region
    $region26: #{tpu_custom_call.1} parent=1 // pred_check
      _
    $region27: #{tpu_custom_call.1} parent=1 // pred_check_branch
      %122 = sbr.rel (0) target = $region29
    $region28: #{tpu_custom_call.1} parent=1 // pred_region
      %123 = dma.done [#allocation4], 128
    $region29: #{tpu_custom_call.1} parent=1 // pred_fallthru
      _
    %124 = vsyncpa [#allocation3], 1
    %125 = vsyncpa [#allocation6], 1
    %126 = vsyncpa [#allocation4], 1

</llo_original>
